<compile_context>
chip_gen: v6e
topology: v6e:2x2x1
jax: 0.10.0
libtpu: 0.0.40
codegen_flags: <defaults>
</compile_context>

<pallas_src>
import jax
import jax.numpy as jnp
import numpy as np
from jax import lax
from jax.experimental import pallas as pl
from jax.experimental.pallas import tpu as pltpu


# ----------------------------------------------------------------------------
# Fused ConcatenationAttention kernel (one batch element per grid step).
#   x_ref   : (1, T, H)   input sequence block
#   w1f_ref : (H, A)      first  half of attention_map_func.weight^T (acts on x_i)
#   w1b_ref : (H, A)      second half of attention_map_func.weight^T (acts on x_j)
#   b1_ref  : (1, A)      attention_map_func.bias
#   w2_ref  : (1, A)      correlated_value_ori_func.weight
#   b2_ref  : (1, 1)      correlated_value_ori_func.bias
#   o_ref   : (1, T, H)   weighted output block
# ----------------------------------------------------------------------------
def _concat_attn_kernel(x_ref, w1f_ref, w1b_ref, b1_ref, w2_ref, b2_ref, o_ref):
    T = x_ref.shape[1]
    x = x_ref[0]                                                    # (T, H)

    # Split-linear projections (hoisted out of the O(T^2) pairwise work).
    a = jnp.dot(x, w1f_ref[...], preferred_element_type=jnp.float32) + b1_ref[...]  # (T, A)
    c = jnp.dot(x, w1b_ref[...], preferred_element_type=jnp.float32)                # (T, A)

    # Pairwise tanh(W1f x_i + W1b x_j + b1), then project to a scalar score.
    h = jnp.tanh(a[:, None, :] + c[None, :, :])                    # (T, T, A)
    scores = jnp.sum(h * w2_ref[...], axis=-1) + b2_ref[...]       # (T, T)

    # exp + strictly-lower-triangular mask (attend only to strictly-past steps),
    # matching torch.triu(ones, 1).permute(1, 0).  Row i=0 is fully masked and
    # yields a zero output via the 1e-10 epsilon (same as the reference).
    att = jnp.exp(scores)
    row = lax.broadcasted_iota(jnp.int32, (T, T), 0)
    col = lax.broadcasted_iota(jnp.int32, (T, T), 1)
    each = jnp.where(col < row, att, 0.0)                          # (T, T)
    accum = jnp.sum(each, axis=-1, keepdims=True) + 1e-10          # (T, 1)
    weight = each / accum                                          # (T, T)

    # Weighted sum over past positions.
    o_ref[0] = jnp.dot(weight, x, preferred_element_type=jnp.float32).astype(o_ref.dtype)


def concat_attention_forward(params, x):
    """x: (B, T, H) float32 -> (B, T, H) float32."""
    B, T, H = x.shape
    A = params["w1f"].shape[1]
    return pl.pallas_call(
        _concat_attn_kernel,
        out_shape=jax.ShapeDtypeStruct((B, T, H), jnp.float32),
        grid_spec=pltpu.PrefetchScalarGridSpec(
            num_scalar_prefetch=0,
            grid=(B,),
            in_specs=[
                pl.BlockSpec((1, T, H), lambda b: (b, 0, 0)),
                pl.BlockSpec((H, A), lambda b: (0, 0)),
                pl.BlockSpec((H, A), lambda b: (0, 0)),
                pl.BlockSpec((1, A), lambda b: (0, 0)),
                pl.BlockSpec((1, A), lambda b: (0, 0)),
                pl.BlockSpec((1, 1), lambda b: (0, 0)),
            ],
            out_specs=pl.BlockSpec((1, T, H), lambda b: (b, 0, 0)),
        ),
        compiler_params=pltpu.CompilerParams(
            dimension_semantics=("parallel",)),
    )(x, params["w1f"], params["w1b"], params["b1"], params["w2"], params["b2"])


# ----------------------------------------------------------------------------
# Deterministic parameter init (shapes from ConcatenationAttention.__init__).
# nn.Linear(2H, A).weight is (A, 2H); stored here pre-split and transposed so
# the concat is never needed:  w1f = W1[:, :H].T,  w1b = W1[:, H:].T.
# ----------------------------------------------------------------------------
def init_params(key, hidden_size, attention_dim):
    H, A = hidden_size, attention_dim
    k1, k2, k3, k4, k5 = jax.random.split(key, 5)

    def w(k, shape, scale=0.1):
        return (scale * jax.random.normal(k, shape)).astype(jnp.float32)

    return {
        "w1f": w(k1, (H, A)),
        "w1b": w(k2, (H, A)),
        "b1": w(k3, (1, A)),
        "w2": w(k4, (1, A)),
        "b2": w(k5, (1, 1)),
    }


# ----------------------------------------------------------------------------
# Pure-JAX reference mirroring the PyTorch forward exactly (builds the full
# (B, T, T, 2H) concat tensor the same way the module does).
# ----------------------------------------------------------------------------
def reference_forward(p, x):
    B, T, H = x.shape
    w1 = jnp.concatenate([p["w1f"], p["w1b"]], axis=0)              # (2H, A)
    f = jnp.broadcast_to(x[:, :, None, :], (B, T, T, H))
    g = jnp.broadcast_to(x[:, None, :, :], (B, T, T, H))
    cat = jnp.concatenate([f, g], axis=-1).reshape(-1, 2 * H)
    corr = jnp.tanh(cat @ w1 + p["b1"][0])
    scores = (corr @ p["w2"][0] + p["b2"][0, 0]).reshape(B, T, T)
    att = jnp.exp(scores)
    flag = jnp.tril(jnp.ones((T, T), jnp.float32), k=-1)            # triu(ones,1).T
    each = att * flag[None]
    accum = each.sum(-1, keepdims=True) + 1e-10
    weight = each / accum
    return jnp.einsum("bij,bjh->bih", weight, x)


if __name__ == "__main__":
    B, T = 2, 8
    hidden_size, attention_dim = 32, 16

    key = jax.random.PRNGKey(0)
    k_param, k_x = jax.random.split(key)
    params = init_params(k_param, hidden_size, attention_dim)
    x = jax.random.normal(k_x, (B, T, hidden_size), dtype=jnp.float32)

    out = concat_attention_forward(params, x)
    jax.block_until_ready(out)
    assert out.shape == (B, T, hidden_size)

    ref = reference_forward(params, x)
    np.testing.assert_allclose(np.asarray(out), np.asarray(ref),
                               rtol=1e-3, atol=1e-4)

    print("KERNEL_OK")
</pallas_src>

<mosaic_0001>
module attributes {stable_mosaic.version = 11 : i64} {
  func.func @_concat_attn_kernel(%arg0: i32, %arg1: memref<1x8x32xf32, #tpu.memory_space<vmem>>, %arg2: memref<32x16xf32, #tpu.memory_space<vmem>>, %arg3: memref<32x16xf32, #tpu.memory_space<vmem>>, %arg4: memref<1x16xf32, #tpu.memory_space<vmem>>, %arg5: memref<1x16xf32, #tpu.memory_space<vmem>>, %arg6: memref<1x1xf32, #tpu.memory_space<vmem>>, %arg7: memref<1x8x32xf32, #tpu.memory_space<vmem>>) attributes {dimension_semantics = [#tpu.dimension_semantics<parallel>], iteration_bounds = array<i64: 2>, scalar_prefetch = 0 : i64, scratch_operands = 0 : i64, tpu.core_type = #tpu.core_type<tc>, window_params = [{transform_indices = @transform_0, window_bounds = array<i64: 1, 8, 32>}, {pipeline_mode = #tpu.pipeline_mode<synchronous>, transform_indices = @transform_1, window_bounds = array<i64: 32, 16>}, {pipeline_mode = #tpu.pipeline_mode<synchronous>, transform_indices = @transform_2, window_bounds = array<i64: 32, 16>}, {pipeline_mode = #tpu.pipeline_mode<synchronous>, transform_indices = @transform_3, window_bounds = array<i64: 1, 16>}, {pipeline_mode = #tpu.pipeline_mode<synchronous>, transform_indices = @transform_4, window_bounds = array<i64: 1, 16>}, {pipeline_mode = #tpu.pipeline_mode<synchronous>, transform_indices = @transform_5, window_bounds = array<i64: 1, 1>}, {transform_indices = @transform_6, window_bounds = array<i64: 1, 8, 32>}]} {
    %c0 = arith.constant 0 : index
    %c0_0 = arith.constant 0 : index
    %c0_1 = arith.constant 0 : index
    %0 = vector.load %arg1[%c0, %c0_0, %c0_1] : memref<1x8x32xf32, #tpu.memory_space<vmem>>, vector<1x8x32xf32>
    %1 = vector.shape_cast %0 : vector<1x8x32xf32> to vector<8x32xf32>
    %c0_2 = arith.constant 0 : index
    %c0_3 = arith.constant 0 : index
    %2 = vector.load %arg2[%c0_2, %c0_3] : memref<32x16xf32, #tpu.memory_space<vmem>>, vector<32x16xf32>
    %cst = arith.constant dense<0.000000e+00> : vector<8x16xf32>
    %3 = tpu.matmul %1, %2, %cst {dimension_numbers = #tpu.dot_dimension_numbers<[1], [0], [0], [1], [0, 0, 1, 1], [], []>} : vector<8x32xf32>, vector<32x16xf32>, vector<8x16xf32> -> vector<8x16xf32>
    %c0_4 = arith.constant 0 : index
    %c0_5 = arith.constant 0 : index
    %4 = vector.load %arg4[%c0_4, %c0_5] : memref<1x16xf32, #tpu.memory_space<vmem>>, vector<1x16xf32>
    %5 = vector.broadcast %4 : vector<1x16xf32> to vector<8x16xf32>
    %6 = arith.addf %3, %5 : vector<8x16xf32>
    %c0_6 = arith.constant 0 : index
    %c0_7 = arith.constant 0 : index
    %7 = vector.load %arg3[%c0_6, %c0_7] : memref<32x16xf32, #tpu.memory_space<vmem>>, vector<32x16xf32>
    %cst_8 = arith.constant dense<0.000000e+00> : vector<8x16xf32>
    %8 = tpu.matmul %1, %7, %cst_8 {dimension_numbers = #tpu.dot_dimension_numbers<[1], [0], [0], [1], [0, 0, 1, 1], [], []>} : vector<8x32xf32>, vector<32x16xf32>, vector<8x16xf32> -> vector<8x16xf32>
    %9 = vector.shape_cast %6 : vector<8x16xf32> to vector<8x1x16xf32>
    %10 = vector.shape_cast %8 : vector<8x16xf32> to vector<1x8x16xf32>
    %11 = vector.broadcast %9 : vector<8x1x16xf32> to vector<8x8x16xf32>
    %12 = vector.broadcast %10 : vector<1x8x16xf32> to vector<8x8x16xf32>
    %13 = arith.addf %11, %12 : vector<8x8x16xf32>
    %14 = math.tanh %13 : vector<8x8x16xf32>
    %c0_9 = arith.constant 0 : index
    %c0_10 = arith.constant 0 : index
    %15 = vector.load %arg5[%c0_9, %c0_10] : memref<1x16xf32, #tpu.memory_space<vmem>>, vector<1x16xf32>
    %16 = vector.shape_cast %15 : vector<1x16xf32> to vector<1x1x16xf32>
    %17 = vector.broadcast %16 : vector<1x1x16xf32> to vector<8x8x16xf32>
    %18 = arith.mulf %14, %17 : vector<8x8x16xf32>
    %cst_11 = arith.constant dense<0.000000e+00> : vector<8x8xf32>
    %19 = vector.multi_reduction <add>, %18, %cst_11 [2] : vector<8x8x16xf32> to vector<8x8xf32>
    %c0_12 = arith.constant 0 : index
    %c0_13 = arith.constant 0 : index
    %20 = vector.load %arg6[%c0_12, %c0_13] : memref<1x1xf32, #tpu.memory_space<vmem>>, vector<1x1xf32>
    %21 = vector.broadcast %20 : vector<1x1xf32> to vector<8x8xf32>
    %22 = arith.addf %19, %21 : vector<8x8xf32>
    %23 = math.exp %22 : vector<8x8xf32>
    %24 = tpu.iota {dimensions = array<i32: 0>} : vector<8x8xi32>
    %25 = tpu.iota {dimensions = array<i32: 1>} : vector<8x8xi32>
    %26 = arith.cmpi slt, %25, %24 : vector<8x8xi32>
    %cst_14 = arith.constant 0.000000e+00 : f32
    %27 = vector.broadcast %cst_14 : f32 to vector<8x8xf32>
    %28 = arith.select %26, %23, %27 : vector<8x8xi1>, vector<8x8xf32>
    %cst_15 = arith.constant dense<0.000000e+00> : vector<8xf32>
    %29 = vector.multi_reduction <add>, %28, %cst_15 [1] : vector<8x8xf32> to vector<8xf32>
    %30 = vector.shape_cast %29 : vector<8xf32> to vector<8x1xf32>
    %cst_16 = arith.constant 1.000000e-10 : f32
    %31 = vector.broadcast %cst_16 : f32 to vector<8x1xf32>
    %32 = arith.addf %30, %31 : vector<8x1xf32>
    %33 = vector.broadcast %32 : vector<8x1xf32> to vector<8x8xf32>
    %34 = arith.divf %28, %33 : vector<8x8xf32>
    %cst_17 = arith.constant dense<0.000000e+00> : vector<8x32xf32>
    %35 = tpu.matmul %34, %1, %cst_17 {dimension_numbers = #tpu.dot_dimension_numbers<[1], [0], [0], [1], [0, 0, 1, 1], [], []>} : vector<8x8xf32>, vector<8x32xf32>, vector<8x32xf32> -> vector<8x32xf32>
    %c0_18 = arith.constant 0 : index
    %c0_19 = arith.constant 0 : index
    %c0_20 = arith.constant 0 : index
    %36 = vector.load %arg7[%c0_18, %c0_19, %c0_20] : memref<1x8x32xf32, #tpu.memory_space<vmem>>, vector<1x8x32xf32>
    %37 = vector.shape_cast %36 : vector<1x8x32xf32> to vector<8x32xf32>
    %38 = vector.shape_cast %35 : vector<8x32xf32> to vector<1x8x32xf32>
    tpu.vector_store %arg7[%c0_18, %c0_19, %c0_20], %38 {strides = array<i32>} : memref<1x8x32xf32, #tpu.memory_space<vmem>>, vector<1x8x32xf32>,
    return
  }
  func.func @transform_0(%arg0: i32) -> (i32, i32, i32) {
    %c0_i32 = arith.constant 0 : i32
    %c0_i32_0 = arith.constant 0 : i32
    %c0_i32_1 = arith.constant 0 : i32
    return %arg0, %c0_i32, %c0_i32_0 : i32, i32, i32
  }
  func.func @transform_1(%arg0: i32) -> (i32, i32) {
    %c0_i32 = arith.constant 0 : i32
    %c0_i32_0 = arith.constant 0 : i32
    %c0_i32_1 = arith.constant 0 : i32
    return %c0_i32, %c0_i32_0 : i32, i32
  }
  func.func @transform_2(%arg0: i32) -> (i32, i32) {
    %c0_i32 = arith.constant 0 : i32
    %c0_i32_0 = arith.constant 0 : i32
    %c0_i32_1 = arith.constant 0 : i32
    return %c0_i32, %c0_i32_0 : i32, i32
  }
  func.func @transform_3(%arg0: i32) -> (i32, i32) {
    %c0_i32 = arith.constant 0 : i32
    %c0_i32_0 = arith.constant 0 : i32
    %c0_i32_1 = arith.constant 0 : i32
    return %c0_i32, %c0_i32_0 : i32, i32
  }
  func.func @transform_4(%arg0: i32) -> (i32, i32) {
    %c0_i32 = arith.constant 0 : i32
    %c0_i32_0 = arith.constant 0 : i32
    %c0_i32_1 = arith.constant 0 : i32
    return %c0_i32, %c0_i32_0 : i32, i32
  }
  func.func @transform_5(%arg0: i32) -> (i32, i32) {
    %c0_i32 = arith.constant 0 : i32
    %c0_i32_0 = arith.constant 0 : i32
    %c0_i32_1 = arith.constant 0 : i32
    return %c0_i32, %c0_i32_0 : i32, i32
  }
  func.func @transform_6(%arg0: i32) -> (i32, i32, i32) {
    %c0_i32 = arith.constant 0 : i32
    %c0_i32_0 = arith.constant 0 : i32
    %c0_i32_1 = arith.constant 0 : i32
    return %arg0, %c0_i32, %c0_i32_0 : i32, i32, i32
  }
}

</mosaic_0001>

<llo_original>
// kernel: tpu_custom_call.1
$region0: #{tpu_custom_call.1}
  #allocation0 [shape = 'u32[]', space=smem, size = 0x4, offset = 0x4, fixed_abs, tag = 'smem constant byte address 0x4 - core index']
  #allocation1 [shape = 'u32[144,128]{1,0:T(1,128)}', space=vmem, size = 0x12000, scoped, tag = 'internal scratch']
  #allocation2 [shape = 'f32[1,1]{1,0:T(1,128)S(1)}', space=vmem, size = 0x200, scoped, tag = 'scoped memory for tpu_custom_call.1']
  %s0 = inlined_call_operand.vmem [shape: f32[2,8,32], index: 0, kind: input, shape index: {}]
  %s1 = inlined_call_operand.vmem [shape: f32[32,16], index: 1, kind: input, shape index: {}]
  %s2 = inlined_call_operand.vmem [shape: f32[32,16], index: 2, kind: input, shape index: {}]
  %s3 = inlined_call_operand.vmem [shape: f32[1,16], index: 3, kind: input, shape index: {}]
  %s4 = inlined_call_operand.vmem [shape: f32[1,16], index: 4, kind: input, shape index: {}]
  %s5 = inlined_call_operand.<no memory space> [shape: f32[1,1], index: 5, kind: input, shape index: {}]
  %s6 = inlined_call_operand.hbm [shape: f32[2,8,32], index: 6, kind: output, shape index: {}]
  %s7 = sld [smem:[#allocation0]]
  $region57: #{tpu_custom_call.1} parent=0
    _
  %s9 = ssub.s32 1, %s7
  %s10 = scalar_select 0, %s9, %s7
  %v11 = vstv %s5
  %12 = vst [vmem:[#allocation2] sm:$0x1] %v11
  $region1: #{tpu_custom_call.1} parent=0
    #allocation3 [shape = 'u8[8192]{0}', space=vmem, size = 0x2000, scoped, tag = 'output window, operand 0']
    #allocation4 [shape = 's32[2]{0}', space=sflag, size = 0x8, scoped, tag = 'scoped memory for tpu_custom_call.1']
    %13 = vsyncpa [#allocation4], 0
    %s14 = scalar_lea.sflag [#allocation4], 1
    %15 = vsyncpa %s14, 0
    loop: start=0, step=1, limit=4
    $region2: #{tpu_custom_call.1} parent=1 // loop_pre_header
      _
    $region3: #{tpu_custom_call.1} parent=1 // loop_header
      %s17 = sphi 0, %s21
      %p18 = scmp.ge.s32.totalorder %s17, 4
      %s27 = sphi 0, %s29
      %s30 = sphi 0, %s27
      %s31 = sphi 0, %s30
      %s47 = sphi 0, %s31
      %s51 = sphi 0, %s51
      %s53 = sphi 0, %s51
      %s54 = sphi 0, %s53
      %s68 = sphi 0, %s54
      %s72 = sphi 0, %s72
      %s74 = sphi 0, %s72
      %s75 = sphi 0, %s74
      %s89 = sphi 0, %s75
      %s93 = sphi 0, %s93
      %s95 = sphi 0, %s93
      %s96 = sphi 0, %s95
      %s110 = sphi 0, %s96
      %s114 = sphi 0, %s114
      %s116 = sphi 0, %s114
      %s117 = sphi 0, %s116
      %s131 = sphi 0, %s117
      %s135 = sphi 0, %s135
      %s137 = sphi 0, %s135
      %s138 = sphi 0, %s137
      %s152 = sphi 0, %s138
      %s158 = sphi 0, %s160
      %s161 = sphi 0, %s158
      %s162 = sphi 0, %s161
      %s178 = sphi 0, %s162
    $region4: #{tpu_custom_call.1} parent=1 // loop_header_branch
      %20 = sbr.rel (%p18) target = $region8
    $region5: #{tpu_custom_call.1} parent=1 // loop_body
      %s22 = ssub.s32 %s17, 1
      %s23 = ssub.s32 %s17, 2
      %s24 = sadd.s32 %s17, 1
      %s25 = ssub.s32 %s17, %s24
      %p26 = scmp.eq.s32.totalorder %s25, 0
      %s28 = sadd.s32 %s27, 1
      %s29 = scalar_select %p26, %s27, %s28
      %p32 = pneg %p26
      %p33 = scmp.eq.s32.totalorder %s17, 1
      %p34 = por %p32, %p33
      %p35 = scmp.ne.s32.totalorder %s27, %s30
      %p36 = scmp.eq.s32.totalorder %s17, 0
      %p37 = por %p35, %p36
      %p38 = scmp.ne.s32.totalorder %s27, %s30
      %p39 = scmp.eq.s32.totalorder %s22, 1
      %p40 = por %p38, %p39
      %p41 = scmp.ne.s32.totalorder %s30, %s31
      %p42 = scmp.eq.s32.totalorder %s22, 0
      %p43 = por %p41, %p42
      %p44 = scmp.ne.s32.totalorder %s30, %s31
      %p45 = scmp.eq.s32.totalorder %s23, 1
      %p46 = por %p44, %p45
      %p48 = scmp.ne.s32.totalorder %s31, %s47
      %p49 = scmp.eq.s32.totalorder %s23, 0
      %p50 = por %p48, %p49
      %s52 = sadd.s32 %s51, 1
      %p55 = scmp.eq.s32.totalorder %s17, 1
      %p56 = scmp.ne.s32.totalorder %s51, %s53
      %p57 = scmp.eq.s32.totalorder %s17, 0
      %p58 = por %p56, %p57
      %p59 = scmp.ne.s32.totalorder %s51, %s53
      %p60 = scmp.eq.s32.totalorder %s22, 1
      %p61 = por %p59, %p60
      %p62 = scmp.ne.s32.totalorder %s53, %s54
      %p63 = scmp.eq.s32.totalorder %s22, 0
      %p64 = por %p62, %p63
      %p65 = scmp.ne.s32.totalorder %s53, %s54
      %p66 = scmp.eq.s32.totalorder %s23, 1
      %p67 = por %p65, %p66
      %p69 = scmp.ne.s32.totalorder %s54, %s68
      %p70 = scmp.eq.s32.totalorder %s23, 0
      %p71 = por %p69, %p70
      %s73 = sadd.s32 %s72, 1
      %p76 = scmp.eq.s32.totalorder %s17, 1
      %p77 = scmp.ne.s32.totalorder %s72, %s74
      %p78 = scmp.eq.s32.totalorder %s17, 0
      %p79 = por %p77, %p78
      %p80 = scmp.ne.s32.totalorder %s72, %s74
      %p81 = scmp.eq.s32.totalorder %s22, 1
      %p82 = por %p80, %p81
      %p83 = scmp.ne.s32.totalorder %s74, %s75
      %p84 = scmp.eq.s32.totalorder %s22, 0
      %p85 = por %p83, %p84
      %p86 = scmp.ne.s32.totalorder %s74, %s75
      %p87 = scmp.eq.s32.totalorder %s23, 1
      %p88 = por %p86, %p87
      %p90 = scmp.ne.s32.totalorder %s75, %s89
      %p91 = scmp.eq.s32.totalorder %s23, 0
      %p92 = por %p90, %p91
      %s94 = sadd.s32 %s93, 1
      %p97 = scmp.eq.s32.totalorder %s17, 1
      %p98 = scmp.ne.s32.totalorder %s93, %s95
      %p99 = scmp.eq.s32.totalorder %s17, 0
      %p100 = por %p98, %p99
      %p101 = scmp.ne.s32.totalorder %s93, %s95
      %p102 = scmp.eq.s32.totalorder %s22, 1
      %p103 = por %p101, %p102
      %p104 = scmp.ne.s32.totalorder %s95, %s96
      %p105 = scmp.eq.s32.totalorder %s22, 0
      %p106 = por %p104, %p105
      %p107 = scmp.ne.s32.totalorder %s95, %s96
      %p108 = scmp.eq.s32.totalorder %s23, 1
      %p109 = por %p107, %p108
      %p111 = scmp.ne.s32.totalorder %s96, %s110
      %p112 = scmp.eq.s32.totalorder %s23, 0
      %p113 = por %p111, %p112
      %s115 = sadd.s32 %s114, 1
      %p118 = scmp.eq.s32.totalorder %s17, 1
      %p119 = scmp.ne.s32.totalorder %s114, %s116
      %p120 = scmp.eq.s32.totalorder %s17, 0
      %p121 = por %p119, %p120
      %p122 = scmp.ne.s32.totalorder %s114, %s116
      %p123 = scmp.eq.s32.totalorder %s22, 1
      %p124 = por %p122, %p123
      %p125 = scmp.ne.s32.totalorder %s116, %s117
      %p126 = scmp.eq.s32.totalorder %s22, 0
      %p127 = por %p125, %p126
      %p128 = scmp.ne.s32.totalorder %s116, %s117
      %p129 = scmp.eq.s32.totalorder %s23, 1
      %p130 = por %p128, %p129
      %p132 = scmp.ne.s32.totalorder %s117, %s131
      %p133 = scmp.eq.s32.totalorder %s23, 0
      %p134 = por %p132, %p133
      %s136 = sadd.s32 %s135, 1
      %p139 = scmp.eq.s32.totalorder %s17, 1
      %p140 = scmp.ne.s32.totalorder %s135, %s137
      %p141 = scmp.eq.s32.totalorder %s17, 0
      %p142 = por %p140, %p141
      %p143 = scmp.ne.s32.totalorder %s135, %s137
      %p144 = scmp.eq.s32.totalorder %s22, 1
      %p145 = por %p143, %p144
      %p146 = scmp.ne.s32.totalorder %s137, %s138
      %p147 = scmp.eq.s32.totalorder %s22, 0
      %p148 = por %p146, %p147
      %p149 = scmp.ne.s32.totalorder %s137, %s138
      %p150 = scmp.eq.s32.totalorder %s23, 1
      %p151 = por %p149, %p150
      %p153 = scmp.ne.s32.totalorder %s138, %s152
      %p154 = scmp.eq.s32.totalorder %s23, 0
      %p155 = por %p153, %p154
      %s156 = ssub.s32 %s17, %s24
      %p157 = scmp.eq.s32.totalorder %s156, 0
      %s159 = sadd.s32 %s158, 1
      %s160 = scalar_select %p157, %s158, %s159
      %p163 = pneg %p157
      %p164 = scmp.eq.s32.totalorder %s17, 1
      %p165 = por %p163, %p164
      %p166 = scmp.ne.s32.totalorder %s158, %s161
      %p167 = scmp.eq.s32.totalorder %s17, 0
      %p168 = por %p166, %p167
      %p169 = scmp.ne.s32.totalorder %s158, %s161
      %p170 = scmp.eq.s32.totalorder %s22, 1
      %p171 = por %p169, %p170
      %p172 = scmp.ne.s32.totalorder %s161, %s162
      %p173 = scmp.eq.s32.totalorder %s22, 0
      %p174 = por %p172, %p173
      %p175 = scmp.ne.s32.totalorder %s161, %s162
      %p176 = scmp.eq.s32.totalorder %s23, 1
      %p177 = por %p175, %p176
      %p179 = scmp.ne.s32.totalorder %s162, %s178
      %p180 = scmp.eq.s32.totalorder %s23, 0
      %p181 = por %p179, %p180
      %p182 = scmp.le.s32.totalorder 1, %s17
      %p183 = scmp.lt.s32.totalorder %s17, 3
      %p184 = pnand %p182, %p183
      %p185 = pneg %p184
      // Predicated region
      $region9: #{tpu_custom_call.1} parent=5 // pred_check
        _
      $region10: #{tpu_custom_call.1} parent=5 // pred_check_branch
        %187 = sbr.rel (%p184) target = $region12
      $region11: #{tpu_custom_call.1} parent=5 // pred_region
        %s188 = ssub.s32 %s17, 1
        // Predicated region
        $region13: #{tpu_custom_call.1} parent=11 // pred_check
          %p189 = pneg %p64
        $region14: #{tpu_custom_call.1} parent=11 // pred_check_branch
          %191 = sbr.rel (%p189) target = $region16
        $region15: #{tpu_custom_call.1} parent=11 // pred_region
          _
        $region16: #{tpu_custom_call.1} parent=11 // pred_fallthru
          _
        // Predicated region
        $region17: #{tpu_custom_call.1} parent=11 // pred_check
          %p192 = pneg %p85
        $region18: #{tpu_custom_call.1} parent=11 // pred_check_branch
          %194 = sbr.rel (%p192) target = $region20
        $region19: #{tpu_custom_call.1} parent=11 // pred_region
          _
        $region20: #{tpu_custom_call.1} parent=11 // pred_fallthru
          _
        // Predicated region
        $region21: #{tpu_custom_call.1} parent=11 // pred_check
          %p195 = pneg %p106
        $region22: #{tpu_custom_call.1} parent=11 // pred_check_branch
          %197 = sbr.rel (%p195) target = $region24
        $region23: #{tpu_custom_call.1} parent=11 // pred_region
          _
        $region24: #{tpu_custom_call.1} parent=11 // pred_fallthru
          _
        // Predicated region
        $region25: #{tpu_custom_call.1} parent=11 // pred_check
          %p198 = pneg %p127
        $region26: #{tpu_custom_call.1} parent=11 // pred_check_branch
          %200 = sbr.rel (%p198) target = $region28
        $region27: #{tpu_custom_call.1} parent=11 // pred_region
          _
        $region28: #{tpu_custom_call.1} parent=11 // pred_fallthru
          _
        // Predicated region
        $region29: #{tpu_custom_call.1} parent=11 // pred_check
          %p201 = pneg %p148
        $region30: #{tpu_custom_call.1} parent=11 // pred_check_branch
          %203 = sbr.rel (%p201) target = $region32
        $region31: #{tpu_custom_call.1} parent=11 // pred_region
          _
        $region32: #{tpu_custom_call.1} parent=11 // pred_fallthru
          _
      $region12: #{tpu_custom_call.1} parent=5 // pred_fallthru
        _
      %p204 = scmp.lt.s32.totalorder %s17, 2
      // Predicated region
      $region33: #{tpu_custom_call.1} parent=5 // pred_check
        %p205 = pneg %p204
      $region34: #{tpu_custom_call.1} parent=5 // pred_check_branch
        %207 = sbr.rel (%p205) target = $region36
      $region35: #{tpu_custom_call.1} parent=5 // pred_region
        // Predicated region
        $region37: #{tpu_custom_call.1} parent=35 // pred_check
          %p208 = pneg %p37
        $region38: #{tpu_custom_call.1} parent=35 // pred_check_branch
          %210 = sbr.rel (%p208) target = $region40
        $region39: #{tpu_custom_call.1} parent=35 // pred_region
          %p211 = scmp.lt.s32.totalorder %s17, 1
          %s212 = scalar_select %p211, %s17, 1
          %s213 = smul.addr %s212, 8
          %s214 = scalar_lea.vmem %s0, %s213
        $region40: #{tpu_custom_call.1} parent=35 // pred_fallthru
          _
      $region36: #{tpu_custom_call.1} parent=5 // pred_fallthru
        _
      %p215 = scmp.le.s32.totalorder 1, %s17
      %p216 = scmp.lt.s32.totalorder %s17, 3
      %p217 = pnand %p215, %p216
      %p218 = pneg %p217
      // Predicated region
      $region41: #{tpu_custom_call.1} parent=5 // pred_check
        _
      $region42: #{tpu_custom_call.1} parent=5 // pred_check_branch
        %220 = sbr.rel (%p217) target = $region44
      $region43: #{tpu_custom_call.1} parent=5 // pred_region
        %s221 = ssub.s32 %s17, 1
        %p222 = scmp.lt.s32.totalorder %s22, 1
        %s223 = scalar_select %p222, %s22, 1
        %s224 = smul.addr %s223, 8
        %s225 = scalar_lea.vmem %s0, %s224
        %p226 = pneg %p43
        %p227 = pneg %p40
        %p228 = pneg %p64
        %p229 = pneg %p61
        %p230 = pneg %p85
        %p231 = pneg %p82
        %p232 = pneg %p106
        %p233 = pneg %p103
        %p234 = pneg %p127
        %p235 = pneg %p124
        %p236 = pneg %p148
        %p237 = pneg %p145
        %p238 = pneg %p174
        %p239 = pneg %p171
        %s240 = sand.u32 %s161, 1
        %s241 = scalar_lea.sflag [#allocation4], %s240
        %s242 = sand.u32 %s161, 1
        %s243 = smul.addr %s242, 8
        %s244 = scalar_lea.vmem [#allocation3], %s243
        %p245 = scmp.lt.s32.totalorder %s22, 1
        %s246 = scalar_select %p245, %s22, 1
        %s247 = smul.addr %s246, 8
        %s248 = scalar_lea.vmem %s0, %s247
        %v249 = vld [vmem:[%s248] sm:$0xff]
        %v250 = vld [vmem:[%s1] sm:$0xff]
        %v251 = vld [vmem:[%s1 + $0x8] sm:$0xff]
        %v252 = vld [vmem:[%s1 + $0x10] sm:$0xff]
        %v253 = vld [vmem:[%s1 + $0x18] sm:$0xff]
        %v254 = vld [vmem:[%s3] sm:$0x1]
        %v256 = vlaneseq
        %v257 = vshrl.u32 %v256, 7
        %v258 = vsub.s32 0, %v257
        %v259 = vrot.slane %v254, %v258
        %vm261 = vcmask 261120
        %v263 = vsel %vm261, %v249, 0
        %265 = vmatprep.subr.mxu0 0.0
        %266 = vmatpush1.msra.mxu0 0.0
        %267 = vmatprep.subr.mxu0 0.0
        %268 = vmatpush1.msra.mxu0 0.0
        %269 = vmatprep.subr.mxu0 0.0
        %270 = vmatpush1.msra.mxu0 0.0
        %271 = vmatprep.subr.mxu0 0.0
        %272 = vmatpush1.msra.mxu0 0.0
        %273 = vmatprep.subr.mxu0 0.0
        %274 = vmatpush1.msra.mxu0 0.0
        %275 = vmatprep.subr.mxu0 0.0
        %276 = vmatpush1.msra.mxu0 0.0
        %277 = vmatprep.subr.mxu0 0.0
        %278 = vmatpush1.msra.mxu0 0.0
        %279 = vmatprep.subr.mxu0 0.0
        %280 = vmatpush1.msra.mxu0 0.0
        %281 = vmatprep.subr.mxu0 0.0
        %282 = vmatpush1.msra.mxu0 0.0
        %283 = vmatprep.subr.mxu0 0.0
        %284 = vmatpush1.msra.mxu0 0.0
        %285 = vmatprep.subr.mxu0 0.0
        %286 = vmatpush1.msra.mxu0 0.0
        %287 = vmatprep.subr.mxu0 0.0
        %288 = vmatpush1.msra.mxu0 0.0
        %289 = vmatprep.subr.mxu0 0.0
        %290 = vmatpush1.msra.mxu0 %v253
        %291 = vmatprep.subr.mxu0 0.0
        %292 = vmatpush1.msra.mxu0 %v252
        %293 = vmatprep.subr.mxu0 0.0
        %294 = vmatpush1.msra.mxu0 %v251
        %295 = vmatprep.subr.mxu0 0.0
        %296 = vmatpush1.msra.mxu0 %v250
        %297 = vmatprep.subr.mxu0 0.0
        %298 = vmatpush2.msra.mxu0 0.0
        %299 = vmatprep.subr.mxu0 0.0
        %300 = vmatpush2.msra.mxu0 0.0
        %301 = vmatprep.subr.mxu0 0.0
        %302 = vmatpush2.msra.mxu0 0.0
        %303 = vmatprep.subr.mxu0 0.0
        %304 = vmatpush2.msra.mxu0 0.0
        %305 = vmatprep.subr.mxu0 0.0
        %306 = vmatpush2.msra.mxu0 0.0
        %307 = vmatprep.subr.mxu0 0.0
        %308 = vmatpush2.msra.mxu0 0.0
        %309 = vmatprep.subr.mxu0 0.0
        %310 = vmatpush2.msra.mxu0 0.0
        %311 = vmatprep.subr.mxu0 0.0
        %312 = vmatpush2.msra.mxu0 0.0
        %313 = vmatprep.subr.mxu0 0.0
        %314 = vmatpush2.msra.mxu0 0.0
        %315 = vmatprep.subr.mxu0 0.0
        %316 = vmatpush2.msra.mxu0 0.0
        %317 = vmatprep.subr.mxu0 0.0
        %318 = vmatpush2.msra.mxu0 0.0
        %319 = vmatprep.subr.mxu0 0.0
        %320 = vmatpush2.msra.mxu0 0.0
        %321 = vmatprep.subr.mxu0 0.0
        %322 = vmatpush2.msra.mxu0 0.0
        %323 = vmatprep.subr.mxu0 0.0
        %324 = vmatpush2.msra.mxu0 0.0
        %325 = vmatprep.subr.mxu0 0.0
        %326 = vmatpush2.msra.mxu0 0.0
        %327 = vmatprep.subr.mxu0 0.0
        %328 = vmatpush2.msra.mxu0 0.0
        %329 = vmatprep.mubr.f32.mxu0 0.0
        %330 = vmatmul.mubr.f32.gmra.mxu0 %v263
        %v331 = vpop.f32.mrf.mxu0
        %v332 = vadd.f32 %v259, %v331
        %v333 = vpop.f32.mrf.mxu0
        %334 = vdwg.mxu0
        %v335 = vld [vmem:[%s2] sm:$0xff]
        %v336 = vld [vmem:[%s2 + $0x8] sm:$0xff]
        %v337 = vld [vmem:[%s2 + $0x10] sm:$0xff]
        %v338 = vld [vmem:[%s2 + $0x18] sm:$0xff]
        %339 = vmatprep.subr.mxu0 0.0
        %340 = vmatpush1.msra.mxu0 0.0
        %341 = vmatprep.subr.mxu0 0.0
        %342 = vmatpush1.msra.mxu0 0.0
        %343 = vmatprep.subr.mxu0 0.0
        %344 = vmatpush1.msra.mxu0 0.0
        %345 = vmatprep.subr.mxu0 0.0
        %346 = vmatpush1.msra.mxu0 0.0
        %347 = vmatprep.subr.mxu0 0.0
        %348 = vmatpush1.msra.mxu0 0.0
        %349 = vmatprep.subr.mxu0 0.0
        %350 = vmatpush1.msra.mxu0 0.0
        %351 = vmatprep.subr.mxu0 0.0
        %352 = vmatpush1.msra.mxu0 0.0
        %353 = vmatprep.subr.mxu0 0.0
        %354 = vmatpush1.msra.mxu0 0.0
        %355 = vmatprep.subr.mxu0 0.0
        %356 = vmatpush1.msra.mxu0 0.0
        %357 = vmatprep.subr.mxu0 0.0
        %358 = vmatpush1.msra.mxu0 0.0
        %359 = vmatprep.subr.mxu0 0.0
        %360 = vmatpush1.msra.mxu0 0.0
        %361 = vmatprep.subr.mxu0 0.0
        %362 = vmatpush1.msra.mxu0 0.0
        %363 = vmatprep.subr.mxu0 0.0
        %364 = vmatpush1.msra.mxu0 %v338
        %365 = vmatprep.subr.mxu0 0.0
        %366 = vmatpush1.msra.mxu0 %v337
        %367 = vmatprep.subr.mxu0 0.0
        %368 = vmatpush1.msra.mxu0 %v336
        %369 = vmatprep.subr.mxu0 0.0
        %370 = vmatpush1.msra.mxu0 %v335
        %371 = vmatprep.subr.mxu0 0.0
        %372 = vmatpush2.msra.mxu0 0.0
        %373 = vmatprep.subr.mxu0 0.0
        %374 = vmatpush2.msra.mxu0 0.0
        %375 = vmatprep.subr.mxu0 0.0
        %376 = vmatpush2.msra.mxu0 0.0
        %377 = vmatprep.subr.mxu0 0.0
        %378 = vmatpush2.msra.mxu0 0.0
        %379 = vmatprep.subr.mxu0 0.0
        %380 = vmatpush2.msra.mxu0 0.0
        %381 = vmatprep.subr.mxu0 0.0
        %382 = vmatpush2.msra.mxu0 0.0
        %383 = vmatprep.subr.mxu0 0.0
        %384 = vmatpush2.msra.mxu0 0.0
        %385 = vmatprep.subr.mxu0 0.0
        %386 = vmatpush2.msra.mxu0 0.0
        %387 = vmatprep.subr.mxu0 0.0
        %388 = vmatpush2.msra.mxu0 0.0
        %389 = vmatprep.subr.mxu0 0.0
        %390 = vmatpush2.msra.mxu0 0.0
        %391 = vmatprep.subr.mxu0 0.0
        %392 = vmatpush2.msra.mxu0 0.0
        %393 = vmatprep.subr.mxu0 0.0
        %394 = vmatpush2.msra.mxu0 0.0
        %395 = vmatprep.subr.mxu0 0.0
        %396 = vmatpush2.msra.mxu0 0.0
        %397 = vmatprep.subr.mxu0 0.0
        %398 = vmatpush2.msra.mxu0 0.0
        %399 = vmatprep.subr.mxu0 0.0
        %400 = vmatpush2.msra.mxu0 0.0
        %401 = vmatprep.subr.mxu0 0.0
        %402 = vmatpush2.msra.mxu0 0.0
        %403 = vmatprep.mubr.f32.mxu0 0.0
        %404 = vmatmul.mubr.f32.gmra.mxu0 %v263
        %v405 = vpop.f32.mrf.mxu0
        %v406 = vadd.f32 0.0, %v405
        %v407 = vpop.f32.mrf.mxu0
        %408 = vdwg.mxu0
        %v410 = vcombine.high %v332, %v332
        %v412 = vunpack.c.l.s4 1966171168
        %v413 = vunpack.c.0.s8 %v412
        %v414 = vlaneseq
        %v415 = vshrl.u32 %v414, 7
        %v416 = vsub.s32 %v413, %v415
        %v417 = vrot.slane %v332, %v416
        %v419 = vunpack.c.l.s4 1966171168
        %v420 = vunpack.c.0.s8 %v419
        %v421 = vlaneseq
        %v422 = vshrl.u32 %v421, 7
        %v423 = vsub.s32 %v420, %v422
        %v424 = vrot.slane %v410, %v423
        %v425 = vcombine.high %v417, %v417
        %v426 = vcombine.high %v424, %v424
        %v428 = vunpack.c.l.s4 1966171168
        %v429 = vunpack.c.0.s8 %v428
        %v430 = vlaneseq
        %v431 = vshrl.u32 %v430, 7
        %v432 = vsub.s32 %v429, %v431
        %v433 = vrot.slane %v417, %v432
        %v435 = vunpack.c.l.s4 1966171168
        %v436 = vunpack.c.0.s8 %v435
        %v437 = vlaneseq
        %v438 = vshrl.u32 %v437, 7
        %v439 = vsub.s32 %v436, %v438
        %v440 = vrot.slane %v424, %v439
        %v442 = vunpack.c.l.s4 1966171168
        %v443 = vunpack.c.0.s8 %v442
        %v444 = vlaneseq
        %v445 = vshrl.u32 %v444, 7
        %v446 = vsub.s32 %v443, %v445
        %v447 = vrot.slane %v425, %v446
        %v449 = vunpack.c.l.s4 1966171168
        %v450 = vunpack.c.0.s8 %v449
        %v451 = vlaneseq
        %v452 = vshrl.u32 %v451, 7
        %v453 = vsub.s32 %v450, %v452
        %v454 = vrot.slane %v426, %v453
        %v455 = vcombine.high %v433, %v433
        %v456 = vcombine.high %v440, %v440
        %v457 = vcombine.high %v447, %v447
        %v458 = vcombine.high %v454, %v454
        %v459 = vlaneseq
        %v460 = vshrl.u32 %v459, 7
        %v461 = vsub.s32 0, %v460
        %v462 = vrot.slane %v433, %v461
        %v463 = vlaneseq
        %v464 = vshrl.u32 %v463, 7
        %v465 = vsub.s32 0, %v464
        %v466 = vrot.slane %v447, %v465
        %v467 = vlaneseq
        %v468 = vshrl.u32 %v467, 7
        %v469 = vsub.s32 0, %v468
        %v470 = vrot.slane %v455, %v469
        %v471 = vlaneseq
        %v472 = vshrl.u32 %v471, 7
        %v473 = vsub.s32 0, %v472
        %v474 = vrot.slane %v457, %v473
        %v475 = vlaneseq
        %v476 = vshrl.u32 %v475, 7
        %v477 = vsub.s32 0, %v476
        %v478 = vrot.slane %v440, %v477
        %v479 = vlaneseq
        %v480 = vshrl.u32 %v479, 7
        %v481 = vsub.s32 0, %v480
        %v482 = vrot.slane %v454, %v481
        %v483 = vlaneseq
        %v484 = vshrl.u32 %v483, 7
        %v485 = vsub.s32 0, %v484
        %v486 = vrot.slane %v456, %v485
        %v487 = vlaneseq
        %v488 = vshrl.u32 %v487, 7
        %v489 = vsub.s32 0, %v488
        %v490 = vrot.slane %v458, %v489
        %v499 = vadd.f32 %v462, %v406
        %v500 = vadd.f32 %v466, %v406
        %v501 = vadd.f32 %v470, %v406
        %v502 = vadd.f32 %v474, %v406
        %v503 = vadd.f32 %v478, %v406
        %v504 = vadd.f32 %v482, %v406
        %v505 = vadd.f32 %v486, %v406
        %v506 = vadd.f32 %v490, %v406
        %v507 = vtanh.pop %v499
        %v508 = vtanh.pop %v500
        %v509 = vtanh.pop %v501
        %v510 = vtanh.pop %v502
        %v511 = vtanh.pop %v503
        %v512 = vtanh.pop %v504
        %v513 = vtanh.pop %v505
        %v514 = vtanh.pop %v506
        %v515 = vld [vmem:[%s4] sm:$0x1]
        %v517 = vlaneseq
        %v518 = vshrl.u32 %v517, 7
        %v519 = vsub.s32 0, %v518
        %v520 = vrot.slane %v515, %v519
        %v522 = vmul.f32 %v507, %v520
        %v523 = vmul.f32 %v508, %v520
        %v524 = vmul.f32 %v509, %v520
        %v525 = vmul.f32 %v510, %v520
        %v526 = vmul.f32 %v511, %v520
        %v527 = vmul.f32 %v512, %v520
        %v528 = vmul.f32 %v513, %v520
        %v529 = vmul.f32 %v514, %v520
        %vm530 = vcmask 130048
        %v531 = vsel %vm530, %v522, 0.0
        %532 = vadd.xlane.f32.xlu0 %v531
        %v533 = vpop.xlane.xlu0 %532
        %v534 = vsel %vm530, %v523, 0.0
        %535 = vadd.xlane.f32.xlu0 %v534
        %v536 = vpop.xlane.xlu0 %535
        %v537 = vsel %vm530, %v524, 0.0
        %538 = vadd.xlane.f32.xlu0 %v537
        %v539 = vpop.xlane.xlu0 %538
        %v540 = vsel %vm530, %v525, 0.0
        %541 = vadd.xlane.f32.xlu0 %v540
        %v542 = vpop.xlane.xlu0 %541
        %v543 = vsel %vm530, %v526, 0.0
        %544 = vadd.xlane.f32.xlu0 %v543
        %v545 = vpop.xlane.xlu0 %544
        %v546 = vsel %vm530, %v527, 0.0
        %547 = vadd.xlane.f32.xlu0 %v546
        %v548 = vpop.xlane.xlu0 %547
        %v549 = vsel %vm530, %v528, 0.0
        %550 = vadd.xlane.f32.xlu0 %v549
        %v551 = vpop.xlane.xlu0 %550
        %v552 = vsel %vm530, %v529, 0.0
        %553 = vadd.xlane.f32.xlu0 %v552
        %v554 = vpop.xlane.xlu0 %553
        %v555 = vld [vmem:[#allocation2] sm:$0x1]
        %v557 = vlaneseq
        %v558 = vshrl.u32 %v557, 7
        %v559 = vsub.s32 0, %v558
        %v560 = vrot.slane %v555, %v559
        %561 = vset.pattern.permute.xlu0 0
        %562 = vperm.xlu0 %561, %v560
        %v563 = vpop.permute.xlu0 %562
        %v565 = vadd.f32 %v533, %v563
        %v566 = vadd.f32 %v536, %v563
        %v567 = vadd.f32 %v539, %v563
        %v568 = vadd.f32 %v542, %v563
        %v569 = vadd.f32 %v545, %v563
        %v570 = vadd.f32 %v548, %v563
        %v571 = vadd.f32 %v551, %v563
        %v572 = vadd.f32 %v554, %v563
        %v573 = vmul.f32 %v565, 1.442695
        %v574 = vpow.pop %v573
        %v575 = vmul.f32 %v566, 1.442695
        %v576 = vpow.pop %v575
        %v577 = vmul.f32 %v567, 1.442695
        %v578 = vpow.pop %v577
        %v579 = vmul.f32 %v568, 1.442695
        %v580 = vpow.pop %v579
        %v581 = vmul.f32 %v569, 1.442695
        %v582 = vpow.pop %v581
        %v583 = vmul.f32 %v570, 1.442695
        %v584 = vpow.pop %v583
        %v585 = vmul.f32 %v571, 1.442695
        %v586 = vpow.pop %v585
        %v587 = vmul.f32 %v572, 1.442695
        %v588 = vpow.pop %v587
        %v589 = vlaneseq
        %v590 = vshrl.u32 %v589, 7
        %v591 = vlaneseq
        %v592 = vand.u32 %v591, 127
        %vm593 = vcmp.lt.s32.totalorder %v592, %v590
        %v602 = vlaneseq
        %v603 = vshrl.u32 %v602, 7
        %v604 = vsub.s32 %v592, %v603
        %v605 = vrot.slane %v574, %v604
        %v606 = vlaneseq
        %v607 = vshrl.u32 %v606, 7
        %v608 = vsub.s32 %v592, %v607
        %v609 = vrot.slane %v576, %v608
        %v610 = vlaneseq
        %v611 = vshrl.u32 %v610, 7
        %v612 = vsub.s32 %v592, %v611
        %v613 = vrot.slane %v578, %v612
        %v614 = vlaneseq
        %v615 = vshrl.u32 %v614, 7
        %v616 = vsub.s32 %v592, %v615
        %v617 = vrot.slane %v580, %v616
        %v618 = vlaneseq
        %v619 = vshrl.u32 %v618, 7
        %v620 = vsub.s32 %v592, %v619
        %v621 = vrot.slane %v582, %v620
        %v622 = vlaneseq
        %v623 = vshrl.u32 %v622, 7
        %v624 = vsub.s32 %v592, %v623
        %v625 = vrot.slane %v584, %v624
        %v626 = vlaneseq
        %v627 = vshrl.u32 %v626, 7
        %v628 = vsub.s32 %v592, %v627
        %v629 = vrot.slane %v586, %v628
        %v630 = vlaneseq
        %v631 = vshrl.u32 %v630, 7
        %v632 = vsub.s32 %v592, %v631
        %v633 = vrot.slane %v588, %v632
        %vm634 = vcmask 1041409
        %v635 = vsel %vm634, %v609, %v605
        %vm636 = vcmask 1042434
        %v637 = vsel %vm636, %v613, %v635
        %vm638 = vcmask 1043459
        %v639 = vsel %vm638, %v617, %v637
        %vm640 = vcmask 1044484
        %v641 = vsel %vm640, %v621, %v639
        %vm642 = vcmask 1045509
        %v643 = vsel %vm642, %v625, %v641
        %vm644 = vcmask 1046534
        %v645 = vsel %vm644, %v629, %v643
        %vm646 = vcmask 1047559
        %v647 = vsel %vm646, %v633, %v645
        %v649 = vsel %vm593, %v647, 0.0
        %vm650 = vcmask 64512
        %v651 = vsel %vm650, %v649, 0.0
        %652 = vadd.xlane.f32.xlu0 %v651
        %v653 = vpop.xlane.xlu0 %652
        %v654 = vadd.f32 %v653, 1e-10
        %v655 = vrcp.pop %v654
        %v656 = vmul.f32 %v649, %v655
        %v658 = vsel %vm650, %v656, 0
        %660 = vmatprep.subr.mxu0 0.0
        %661 = vmatpush1.msra.mxu0 0.0
        %662 = vmatprep.subr.mxu0 0.0
        %663 = vmatpush1.msra.mxu0 0.0
        %664 = vmatprep.subr.mxu0 0.0
        %665 = vmatpush1.msra.mxu0 0.0
        %666 = vmatprep.subr.mxu0 0.0
        %667 = vmatpush1.msra.mxu0 0.0
        %668 = vmatprep.subr.mxu0 0.0
        %669 = vmatpush1.msra.mxu0 0.0
        %670 = vmatprep.subr.mxu0 0.0
        %671 = vmatpush1.msra.mxu0 0.0
        %672 = vmatprep.subr.mxu0 0.0
        %673 = vmatpush1.msra.mxu0 0.0
        %674 = vmatprep.subr.mxu0 0.0
        %675 = vmatpush1.msra.mxu0 0.0
        %676 = vmatprep.subr.mxu0 0.0
        %677 = vmatpush1.msra.mxu0 0.0
        %678 = vmatprep.subr.mxu0 0.0
        %679 = vmatpush1.msra.mxu0 0.0
        %680 = vmatprep.subr.mxu0 0.0
        %681 = vmatpush1.msra.mxu0 0.0
        %682 = vmatprep.subr.mxu0 0.0
        %683 = vmatpush1.msra.mxu0 0.0
        %684 = vmatprep.subr.mxu0 0.0
        %685 = vmatpush1.msra.mxu0 0.0
        %686 = vmatprep.subr.mxu0 0.0
        %687 = vmatpush1.msra.mxu0 0.0
        %688 = vmatprep.subr.mxu0 0.0
        %689 = vmatpush1.msra.mxu0 0.0
        %690 = vmatprep.subr.mxu0 0.0
        %691 = vmatpush1.msra.mxu0 %v249
        %692 = vmatprep.subr.mxu0 0.0
        %693 = vmatpush2.msra.mxu0 0.0
        %694 = vmatprep.subr.mxu0 0.0
        %695 = vmatpush2.msra.mxu0 0.0
        %696 = vmatprep.subr.mxu0 0.0
        %697 = vmatpush2.msra.mxu0 0.0
        %698 = vmatprep.subr.mxu0 0.0
        %699 = vmatpush2.msra.mxu0 0.0
        %700 = vmatprep.subr.mxu0 0.0
        %701 = vmatpush2.msra.mxu0 0.0
        %702 = vmatprep.subr.mxu0 0.0
        %703 = vmatpush2.msra.mxu0 0.0
        %704 = vmatprep.subr.mxu0 0.0
        %705 = vmatpush2.msra.mxu0 0.0
        %706 = vmatprep.subr.mxu0 0.0
        %707 = vmatpush2.msra.mxu0 0.0
        %708 = vmatprep.subr.mxu0 0.0
        %709 = vmatpush2.msra.mxu0 0.0
        %710 = vmatprep.subr.mxu0 0.0
        %711 = vmatpush2.msra.mxu0 0.0
        %712 = vmatprep.subr.mxu0 0.0
        %713 = vmatpush2.msra.mxu0 0.0
        %714 = vmatprep.subr.mxu0 0.0
        %715 = vmatpush2.msra.mxu0 0.0
        %716 = vmatprep.subr.mxu0 0.0
        %717 = vmatpush2.msra.mxu0 0.0
        %718 = vmatprep.subr.mxu0 0.0
        %719 = vmatpush2.msra.mxu0 0.0
        %720 = vmatprep.subr.mxu0 0.0
        %721 = vmatpush2.msra.mxu0 0.0
        %722 = vmatprep.subr.mxu0 0.0
        %723 = vmatpush2.msra.mxu0 0.0
        %724 = vmatprep.mubr.f32.mxu0 0.0
        %725 = vmatmul.mubr.f32.gmra.mxu0 %v658
        %v726 = vpop.f32.mrf.mxu0
        %v727 = vadd.f32 0.0, %v726
        %v728 = vpop.f32.mrf.mxu0
        %729 = vdwg.mxu0
        %730 = vst.msk [vmem:[%s244] sm:$0xff] %vm261, %v727
        %s731 = sand.u32 %s161, 1
        %s732 = scalar_lea.sflag [#allocation4], %s731
        %s733 = sand.u32 %s161, 1
        %s734 = smul.addr %s733, 8
        %s735 = scalar_lea.vmem [#allocation3], %s734
        // Predicated region
        $region45: #{tpu_custom_call.1} parent=43 // pred_check
          %p736 = pneg %p171
        $region46: #{tpu_custom_call.1} parent=43 // pred_check_branch
          %738 = sbr.rel (%p736) target = $region48
        $region47: #{tpu_custom_call.1} parent=43 // pred_region
          %s740 = ssub.s32 128, 128
          %741 = vsyncadd %s732, %s740
          %s742 = smul.addr %s22, 128
          %s743 = scalar_lea.hbm %s6, %s742
          %s745 = sshll.u32 %s735, 4
          %s746 = int_to_ptr.vmem [resolvable:$true] %s745
          %748 = dma.vmem_to_hbm [thread:$0]  %s746, 128, %s743, %s732
        $region48: #{tpu_custom_call.1} parent=43 // pred_fallthru
          _
      $region44: #{tpu_custom_call.1} parent=5 // pred_fallthru
        _
      %p749 = scmp.le.s32.totalorder 2, %s17
      // Predicated region
      $region49: #{tpu_custom_call.1} parent=5 // pred_check
        %p750 = pneg %p749
      $region50: #{tpu_custom_call.1} parent=5 // pred_check_branch
        %752 = sbr.rel (%p750) target = $region52
      $region51: #{tpu_custom_call.1} parent=5 // pred_region
        %s753 = ssub.s32 %s17, 2
        // Predicated region
        $region53: #{tpu_custom_call.1} parent=51 // pred_check
          %p754 = pneg %p177
        $region54: #{tpu_custom_call.1} parent=51 // pred_check_branch
          %756 = sbr.rel (%p754) target = $region56
        $region55: #{tpu_custom_call.1} parent=51 // pred_region
          %s757 = sand.u32 %s162, 1
          %s758 = scalar_lea.sflag [#allocation4], %s757
          %s759 = sand.u32 %s162, 1
          %s760 = smul.addr %s759, 8
          %s761 = scalar_lea.vmem [#allocation3], %s760
          %762 = dma.done %s758, 128
        $region56: #{tpu_custom_call.1} parent=51 // pred_fallthru
          _
      $region52: #{tpu_custom_call.1} parent=5 // pred_fallthru
        _
    $region6: #{tpu_custom_call.1} parent=1 // loop_footer
      %s21 = sadd.s32 1, %s17
    $region7: #{tpu_custom_call.1} parent=1 // loop_footer_branch
      %16 = sbr.rel target = $region3
    $region8: #{tpu_custom_call.1} parent=1 // loop_exit
      _
    %763 = vsyncpa [#allocation4], 1
    %s764 = scalar_lea.sflag [#allocation4], 1
    %765 = vsyncpa %s764, 1

</llo_original>
